<compile_context>
chip_gen: v5e
topology: v5e:2x2
jax: 0.10.0
libtpu: 0.0.40
codegen_flags: <defaults>
</compile_context>

<pallas_src>
import functools

import jax
import jax.numpy as jnp
from jax.experimental import pallas as pl
from jax.experimental.pallas import tpu as pltpu


# ---------------------------------------------------------------------------
# Helpers.
# ---------------------------------------------------------------------------
def _round_up(x: int, m: int) -> int:
    return ((x + m - 1) // m) * m


def _pad2d(a, rows: int, cols: int):
    pr, pc = rows - a.shape[0], cols - a.shape[1]
    if pr or pc:
        a = jnp.pad(a, ((0, pr), (0, pc)))
    return a


def _device_kind() -> str:
    try:
        return jax.devices()[0].device_kind.lower()
    except Exception:
        return ""


def _vmem_capacity_bytes() -> int:
    """Per-TensorCore physical VMEM, generation-aware."""
    try:
        return int(pltpu.get_tpu_info().vmem_capacity_bytes)
    except Exception:
        pass
    kind = _device_kind()
    if "v7" in kind:
        return 64 * 2 ** 20
    if "v5" in kind or "v6" in kind:
        return 128 * 2 ** 20
    return 64 * 2 ** 20  # conservative default for unknown chips


def _lane_multiple(dim: int) -> int:
    """v6e/v7x MXUs are 2x256x256: pad wide feature dims to 256. v5e: 128."""
    kind = _device_kind()
    if dim >= 192 and ("v6" in kind or "v7" in kind):
        return 256
    return 128


def _const_block_spec(shape, single_buffer: bool):
    """Whole-array operand with a grid-invariant index_map.

    With single_buffer=True we request a single pipeline buffer
    (pipeline_mode=pl.Buffered(1)) so VMEM-resident weights are not
    needlessly double-buffered.
    """
    if single_buffer:
        try:
            return pl.BlockSpec(shape, lambda i: (0, 0),
                                pipeline_mode=pl.Buffered(1))
        except TypeError:
            pass  # jax without pipeline_mode support on BlockSpec
    return pl.BlockSpec(shape, lambda i: (0, 0))


# ---------------------------------------------------------------------------
# Fused MLP kernel: one batch tile per grid step, all layers in the body.
# ---------------------------------------------------------------------------
def _make_mlp_kernel(n_layers: int, relu_mask, compute_dtype):
    def kernel(*refs):
        x_ref = refs[0]
        o_ref = refs[-1]
        wb_refs = refs[1:-1]

        # x already arrives in compute_dtype (bf16); all matmuls are
        # bf16 x bf16 with f32 accumulation.
        h = x_ref[...]
        for i in range(n_layers):
            w_ref = wb_refs[2 * i]
            b_ref = wb_refs[2 * i + 1]
            y = jnp.dot(h, w_ref[...], preferred_element_type=jnp.float32)
            y = y + b_ref[...].astype(jnp.float32)   # (1, Dp) broadcasts over rows
            if relu_mask[i]:
                y = jnp.maximum(y, 0.0)
            # Carry the inter-layer activation in compute_dtype (identical cast
            # point to what the next matmul would apply); final layer stays f32.
            h = y if i == n_layers - 1 else y.astype(compute_dtype)
        o_ref[...] = h.astype(o_ref.dtype)

    return kernel


def mlp_forward(x, params, output_dim, *,
                compute_dtype=jnp.bfloat16, out_dtype=jnp.float32,
                single_buffer_weights=True):
    """Fused MLP forward.

    x:      [B, Din] float32
    params: list of (W [Din_pad, Dout_pad] (bf16), b [1, Dout_pad] (f32)),
            feature dims already padded (128/256-lane-dense, zero padding).
    Returns [B, output_dim] in out_dtype.
    """
    B, _ = x.shape
    din_pad = params[0][0].shape[0]
    dout_pad = params[-1][0].shape[1]
    n_layers = len(params)

    comp_size = jnp.dtype(compute_dtype).itemsize
    out_size = jnp.dtype(out_dtype).itemsize
    max_dim = max([din_pad] + [int(w.shape[1]) for w, _ in params])

    # Weights/biases counted once when single-buffered, twice otherwise.
    w_bytes = sum(int(w.size) * w.dtype.itemsize + int(b.size) * b.dtype.itemsize
                  for w, b in params)
    wb_mult = 1 if single_buffer_weights else 2

    vmem_cap = _vmem_capacity_bytes()
    limit_cap = max(vmem_cap - 8 * 2 ** 20, 16 * 2 ** 20)  # compiler headroom

    bp8 = _round_up(max(B, 1), 8)

    def tile_bytes(tm):
        return (2 * tm * din_pad * comp_size      # double-buffered x tile
                + 2 * tm * dout_pad * out_size    # double-buffered out tile
                + wb_mult * w_bytes               # resident weights
                + 3 * tm * max_dim * 4)           # f32 y + bf16 h headroom

    # Largest batch tile (multiple of 8, capped at 512) that fits the budget.
    tm = 8
    for cand in (512, 256, 128, 64, 32, 16, 8):
        cand = min(cand, bp8)
        if tile_bytes(cand) <= int(0.85 * limit_cap):
            tm = cand
            break
    b_pad = _round_up(bp8, tm)
    grid = (b_pad // tm,)

    # Input tile is consumed in bf16: cast in the wrapper (halves DMA + VMEM).
    x_pad = _pad2d(x.astype(compute_dtype), b_pad, din_pad)

    # ReLU after every layer except the last (matches the nn.Sequential trunk).
    relu_mask = tuple(i != n_layers - 1 for i in range(n_layers))
    kernel = _make_mlp_kernel(n_layers, relu_mask, compute_dtype)

    # BlockSpecs: batch-tiled activation, whole-array single-buffered weights.
    in_specs = [pl.BlockSpec((tm, din_pad), lambda i: (i, 0))]
    flat_wb = []
    for w, b in params:
        flat_wb += [w, b]
        in_specs.append(_const_block_spec(w.shape, single_buffer_weights))
        in_specs.append(_const_block_spec(b.shape, single_buffer_weights))
    out_spec = pl.BlockSpec((tm, dout_pad), lambda i: (i, 0))

    # Cost estimate (advisory: weights counted once).
    flops = 2 * b_pad * sum(int(w.shape[0]) * int(w.shape[1]) for w, _ in params)
    bytes_accessed = (x_pad.size * comp_size + w_bytes
                      + b_pad * dout_pad * out_size)
    cost = pl.CostEstimate(flops=int(flops), transcendentals=0,
                           bytes_accessed=int(bytes_accessed))

    vmem_limit = int(min(max(int(1.25 * tile_bytes(tm)), 16 * 2 ** 20), limit_cap))

    # Real 2-TC sharding on v7x needs CORE_PARALLEL; only request it when the
    # grid actually splits (>= 2 tiles). Otherwise plain "parallel".
    if grid[0] >= 2 and "v7" in _device_kind():
        dim_sem = (getattr(pltpu, "CORE_PARALLEL", "parallel"),)
    else:
        dim_sem = ("parallel",)

    out_pad = pl.pallas_call(
        kernel,
        out_shape=jax.ShapeDtypeStruct((b_pad, dout_pad), out_dtype),
        grid=grid,
        in_specs=in_specs,
        out_specs=out_spec,
        compiler_params=pltpu.CompilerParams(
            dimension_semantics=dim_sem,
            vmem_limit_bytes=vmem_limit,
        ),
        cost_estimate=cost,
    )(x_pad, *flat_wb)

    return out_pad[:B, :output_dim]


# ---------------------------------------------------------------------------
# Deterministic parameter init (mirrors weight_init: orthogonal W, zero bias).
# ---------------------------------------------------------------------------
def orthogonal_init(key, out_dim, in_dim):
    """Semantics of torch.nn.init.orthogonal_ (gain=1) on a (out, in) matrix."""
    rows, cols = out_dim, in_dim
    flat_shape = (rows, cols) if rows >= cols else (cols, rows)
    a = jax.random.normal(key, flat_shape, dtype=jnp.float32)
    q, r = jnp.linalg.qr(a)
    d = jnp.sign(jnp.diagonal(r))
    d = jnp.where(d == 0, 1.0, d)   # guard: never zero out a column of Q
    q = q * d[None, :]
    if rows < cols:
        q = q.T
    return q  # shape (out_dim, in_dim)


def init_mlp_params(key, input_dim, hidden_dim, output_dim, hidden_depth,
                    param_dtype=jnp.bfloat16):
    """Per layer: (W [Din_pad, Dout_pad] param_dtype, b [1, Dout_pad] f32).

    Feature dims are zero-padded to the MXU-aware lane multiple (128, or 256
    on v6e/v7x for wide dims) so every matmul/store in the fused kernel is
    lane-dense. Zero padding is inert for the forward pass.
    """
    if hidden_depth == 0:
        dims = [(input_dim, output_dim)]
    else:
        dims = [(input_dim, hidden_dim)]
        dims += [(hidden_dim, hidden_dim)] * (hidden_depth - 1)
        dims += [(hidden_dim, output_dim)]

    params = []
    keys = jax.random.split(key, len(dims))
    for k, (din, dout) in zip(keys, dims):
        w_torch = orthogonal_init(k, dout, din)            # (out, in) like nn.Linear
        w = jnp.asarray(w_torch).T                         # store as (in, out)
        din_pad = _round_up(din, _lane_multiple(din))
        dout_pad = _round_up(dout, _lane_multiple(dout))
        w = _pad2d(w, din_pad, dout_pad).astype(param_dtype)
        b = jnp.zeros((1, dout_pad), dtype=jnp.float32)    # bias filled with 0.0
        params.append((w, b))
    return params


# ---------------------------------------------------------------------------
# Pure-JAX reference (identical bf16 cast sequence) for a sanity check.
# ---------------------------------------------------------------------------
def mlp_reference(x, params, output_dim, compute_dtype=jnp.bfloat16):
    B, _ = x.shape
    din_pad = params[0][0].shape[0]
    h = _pad2d(x.astype(jnp.float32), B, din_pad)
    n_layers = len(params)
    for i, (w, b) in enumerate(params):
        y = jnp.dot(h.astype(compute_dtype), w,
                    preferred_element_type=jnp.float32)
        y = y + b.astype(jnp.float32)
        if i != n_layers - 1:
            y = jnp.maximum(y, 0.0)
        h = y
    return h[:, :output_dim]


if __name__ == "__main__":
    # Small shapes consistent with the module.
    batch = 8
    input_dim = 32
    hidden_dim = 32
    output_dim = 8
    hidden_depth = 2

    key = jax.random.PRNGKey(0)
    k_params, k_x = jax.random.split(key)

    params = init_mlp_params(k_params, input_dim, hidden_dim, output_dim,
                             hidden_depth, param_dtype=jnp.bfloat16)
    x = jax.random.normal(k_x, (batch, input_dim), dtype=jnp.float32)

    try:
        fwd = jax.jit(functools.partial(mlp_forward, output_dim=output_dim))
        out = jax.block_until_ready(fwd(x, params))
    except Exception:
        # Feature-detection fallback: this jax build may not accept
        # pipeline_mode=pl.Buffered(1) on top-level pallas_call BlockSpecs.
        fwd = jax.jit(functools.partial(mlp_forward, output_dim=output_dim,
                                        single_buffer_weights=False))
        out = jax.block_until_ready(fwd(x, params))

    ref = mlp_reference(x, params, output_dim)
    assert out.shape == (batch, output_dim)
    assert jnp.allclose(out, ref, atol=2e-2, rtol=2e-2), (
        f"max abs err {jnp.max(jnp.abs(out - ref))}")

    print("KERNEL_OK")
</pallas_src>

<mosaic_0001>
module attributes {stable_mosaic.version = 11 : i64} {
  func.func @kernel(%arg0: i32, %arg1: memref<8x128xbf16, #tpu.memory_space<vmem>>, %arg2: memref<128x128xbf16, #tpu.memory_space<vmem>>, %arg3: memref<1x128xf32, #tpu.memory_space<vmem>>, %arg4: memref<128x128xbf16, #tpu.memory_space<vmem>>, %arg5: memref<1x128xf32, #tpu.memory_space<vmem>>, %arg6: memref<128x128xbf16, #tpu.memory_space<vmem>>, %arg7: memref<1x128xf32, #tpu.memory_space<vmem>>, %arg8: memref<8x128xf32, #tpu.memory_space<vmem>>) attributes {dimension_semantics = [#tpu.dimension_semantics<parallel>], iteration_bounds = array<i64: 1>, scalar_prefetch = 0 : i64, scratch_operands = 0 : i64, tpu.core_type = #tpu.core_type<tc>, window_params = [{transform_indices = @transform_0, window_bounds = array<i64: 8, 128>}, {pipeline_mode = #tpu.pipeline_mode<synchronous>, transform_indices = @transform_1, window_bounds = array<i64: 128, 128>}, {pipeline_mode = #tpu.pipeline_mode<synchronous>, transform_indices = @transform_2, window_bounds = array<i64: 1, 128>}, {pipeline_mode = #tpu.pipeline_mode<synchronous>, transform_indices = @transform_3, window_bounds = array<i64: 128, 128>}, {pipeline_mode = #tpu.pipeline_mode<synchronous>, transform_indices = @transform_4, window_bounds = array<i64: 1, 128>}, {pipeline_mode = #tpu.pipeline_mode<synchronous>, transform_indices = @transform_5, window_bounds = array<i64: 128, 128>}, {pipeline_mode = #tpu.pipeline_mode<synchronous>, transform_indices = @transform_6, window_bounds = array<i64: 1, 128>}, {transform_indices = @transform_7, window_bounds = array<i64: 8, 128>}]} {
    %c0 = arith.constant 0 : index
    %c0_0 = arith.constant 0 : index
    %0 = vector.load %arg1[%c0, %c0_0] : memref<8x128xbf16, #tpu.memory_space<vmem>>, vector<8x128xbf16>
    %c0_1 = arith.constant 0 : index
    %c0_2 = arith.constant 0 : index
    %1 = vector.load %arg2[%c0_1, %c0_2] : memref<128x128xbf16, #tpu.memory_space<vmem>>, vector<128x128xbf16>
    %cst = arith.constant dense<0.000000e+00> : vector<8x128xf32>
    %2 = tpu.matmul %0, %1, %cst {dimension_numbers = #tpu.dot_dimension_numbers<[1], [0], [0], [1], [0, 0, 1, 1], [], []>} : vector<8x128xbf16>, vector<128x128xbf16>, vector<8x128xf32> -> vector<8x128xf32>
    %c0_3 = arith.constant 0 : index
    %c0_4 = arith.constant 0 : index
    %3 = vector.load %arg3[%c0_3, %c0_4] : memref<1x128xf32, #tpu.memory_space<vmem>>, vector<1x128xf32>
    %4 = vector.broadcast %3 : vector<1x128xf32> to vector<8x128xf32>
    %5 = arith.addf %2, %4 : vector<8x128xf32>
    %cst_5 = arith.constant 0.000000e+00 : f32
    %6 = vector.broadcast %cst_5 : f32 to vector<8x128xf32>
    %7 = arith.maximumf %5, %6 : vector<8x128xf32>
    %8 = arith.truncf %7 : vector<8x128xf32> to vector<8x128xbf16>
    %c0_6 = arith.constant 0 : index
    %c0_7 = arith.constant 0 : index
    %9 = vector.load %arg4[%c0_6, %c0_7] : memref<128x128xbf16, #tpu.memory_space<vmem>>, vector<128x128xbf16>
    %cst_8 = arith.constant dense<0.000000e+00> : vector<8x128xf32>
    %10 = tpu.matmul %8, %9, %cst_8 {dimension_numbers = #tpu.dot_dimension_numbers<[1], [0], [0], [1], [0, 0, 1, 1], [], []>} : vector<8x128xbf16>, vector<128x128xbf16>, vector<8x128xf32> -> vector<8x128xf32>
    %c0_9 = arith.constant 0 : index
    %c0_10 = arith.constant 0 : index
    %11 = vector.load %arg5[%c0_9, %c0_10] : memref<1x128xf32, #tpu.memory_space<vmem>>, vector<1x128xf32>
    %12 = vector.broadcast %11 : vector<1x128xf32> to vector<8x128xf32>
    %13 = arith.addf %10, %12 : vector<8x128xf32>
    %cst_11 = arith.constant 0.000000e+00 : f32
    %14 = vector.broadcast %cst_11 : f32 to vector<8x128xf32>
    %15 = arith.maximumf %13, %14 : vector<8x128xf32>
    %16 = arith.truncf %15 : vector<8x128xf32> to vector<8x128xbf16>
    %c0_12 = arith.constant 0 : index
    %c0_13 = arith.constant 0 : index
    %17 = vector.load %arg6[%c0_12, %c0_13] : memref<128x128xbf16, #tpu.memory_space<vmem>>, vector<128x128xbf16>
    %cst_14 = arith.constant dense<0.000000e+00> : vector<8x128xf32>
    %18 = tpu.matmul %16, %17, %cst_14 {dimension_numbers = #tpu.dot_dimension_numbers<[1], [0], [0], [1], [0, 0, 1, 1], [], []>} : vector<8x128xbf16>, vector<128x128xbf16>, vector<8x128xf32> -> vector<8x128xf32>
    %c0_15 = arith.constant 0 : index
    %c0_16 = arith.constant 0 : index
    %19 = vector.load %arg7[%c0_15, %c0_16] : memref<1x128xf32, #tpu.memory_space<vmem>>, vector<1x128xf32>
    %20 = vector.broadcast %19 : vector<1x128xf32> to vector<8x128xf32>
    %21 = arith.addf %18, %20 : vector<8x128xf32>
    %c0_17 = arith.constant 0 : index
    %c0_18 = arith.constant 0 : index
    %22 = vector.load %arg8[%c0_17, %c0_18] : memref<8x128xf32, #tpu.memory_space<vmem>>, vector<8x128xf32>
    tpu.vector_store %arg8[%c0_17, %c0_18], %21 {strides = array<i32>} : memref<8x128xf32, #tpu.memory_space<vmem>>, vector<8x128xf32>,
    return
  }
  func.func @transform_0(%arg0: i32) -> (i32, i32) {
    %c0_i32 = arith.constant 0 : i32
    %c0_i32_0 = arith.constant 0 : i32
    return %arg0, %c0_i32 : i32, i32
  }
  func.func @transform_1(%arg0: i32) -> (i32, i32) {
    %c0_i32 = arith.constant 0 : i32
    %c0_i32_0 = arith.constant 0 : i32
    %c0_i32_1 = arith.constant 0 : i32
    return %c0_i32, %c0_i32_0 : i32, i32
  }
  func.func @transform_2(%arg0: i32) -> (i32, i32) {
    %c0_i32 = arith.constant 0 : i32
    %c0_i32_0 = arith.constant 0 : i32
    %c0_i32_1 = arith.constant 0 : i32
    return %c0_i32, %c0_i32_0 : i32, i32
  }
  func.func @transform_3(%arg0: i32) -> (i32, i32) {
    %c0_i32 = arith.constant 0 : i32
    %c0_i32_0 = arith.constant 0 : i32
    %c0_i32_1 = arith.constant 0 : i32
    return %c0_i32, %c0_i32_0 : i32, i32
  }
  func.func @transform_4(%arg0: i32) -> (i32, i32) {
    %c0_i32 = arith.constant 0 : i32
    %c0_i32_0 = arith.constant 0 : i32
    %c0_i32_1 = arith.constant 0 : i32
    return %c0_i32, %c0_i32_0 : i32, i32
  }
  func.func @transform_5(%arg0: i32) -> (i32, i32) {
    %c0_i32 = arith.constant 0 : i32
    %c0_i32_0 = arith.constant 0 : i32
    %c0_i32_1 = arith.constant 0 : i32
    return %c0_i32, %c0_i32_0 : i32, i32
  }
  func.func @transform_6(%arg0: i32) -> (i32, i32) {
    %c0_i32 = arith.constant 0 : i32
    %c0_i32_0 = arith.constant 0 : i32
    %c0_i32_1 = arith.constant 0 : i32
    return %c0_i32, %c0_i32_0 : i32, i32
  }
  func.func @transform_7(%arg0: i32) -> (i32, i32) {
    %c0_i32 = arith.constant 0 : i32
    %c0_i32_0 = arith.constant 0 : i32
    return %arg0, %c0_i32 : i32, i32
  }
}

module attributes {stable_mosaic.version = 11 : i64} {
  func.func @kernel(%arg0: i32, %arg1: memref<8x128xbf16, #tpu.memory_space<vmem>>, %arg2: memref<128x128xbf16, #tpu.memory_space<vmem>>, %arg3: memref<1x128xf32, #tpu.memory_space<vmem>>, %arg4: memref<128x128xbf16, #tpu.memory_space<vmem>>, %arg5: memref<1x128xf32, #tpu.memory_space<vmem>>, %arg6: memref<128x128xbf16, #tpu.memory_space<vmem>>, %arg7: memref<1x128xf32, #tpu.memory_space<vmem>>, %arg8: memref<8x128xf32, #tpu.memory_space<vmem>>) attributes {dimension_semantics = [#tpu.dimension_semantics<parallel>], iteration_bounds = array<i64: 1>, scalar_prefetch = 0 : i64, scratch_operands = 0 : i64, tpu.core_type = #tpu.core_type<tc>, window_params = [{transform_indices = @transform_0, window_bounds = array<i64: 8, 128>}, {pipeline_mode = #tpu.pipeline_mode<synchronous>, transform_indices = @transform_1, window_bounds = array<i64: 128, 128>}, {pipeline_mode = #tpu.pipeline_mode<synchronous>, transform_indices = @transform_2, window_bounds = array<i64: 1, 128>}, {pipeline_mode = #tpu.pipeline_mode<synchronous>, transform_indices = @transform_3, window_bounds = array<i64: 128, 128>}, {pipeline_mode = #tpu.pipeline_mode<synchronous>, transform_indices = @transform_4, window_bounds = array<i64: 1, 128>}, {pipeline_mode = #tpu.pipeline_mode<synchronous>, transform_indices = @transform_5, window_bounds = array<i64: 128, 128>}, {pipeline_mode = #tpu.pipeline_mode<synchronous>, transform_indices = @transform_6, window_bounds = array<i64: 1, 128>}, {transform_indices = @transform_7, window_bounds = array<i64: 8, 128>}]} {
    %c0 = arith.constant 0 : index
    %c0_0 = arith.constant 0 : index
    %0 = vector.load %arg1[%c0, %c0_0] : memref<8x128xbf16, #tpu.memory_space<vmem>>, vector<8x128xbf16>
    %c0_1 = arith.constant 0 : index
    %c0_2 = arith.constant 0 : index
    %1 = vector.load %arg2[%c0_1, %c0_2] : memref<128x128xbf16, #tpu.memory_space<vmem>>, vector<128x128xbf16>
    %cst = arith.constant dense<0.000000e+00> : vector<8x128xf32>
    %2 = tpu.matmul %0, %1, %cst {dimension_numbers = #tpu.dot_dimension_numbers<[1], [0], [0], [1], [0, 0, 1, 1], [], []>} : vector<8x128xbf16>, vector<128x128xbf16>, vector<8x128xf32> -> vector<8x128xf32>
    %c0_3 = arith.constant 0 : index
    %c0_4 = arith.constant 0 : index
    %3 = vector.load %arg3[%c0_3, %c0_4] : memref<1x128xf32, #tpu.memory_space<vmem>>, vector<1x128xf32>
    %4 = vector.broadcast %3 : vector<1x128xf32> to vector<8x128xf32>
    %5 = arith.addf %2, %4 : vector<8x128xf32>
    %cst_5 = arith.constant 0.000000e+00 : f32
    %6 = vector.broadcast %cst_5 : f32 to vector<8x128xf32>
    %7 = arith.maximumf %5, %6 : vector<8x128xf32>
    %8 = arith.truncf %7 : vector<8x128xf32> to vector<8x128xbf16>
    %c0_6 = arith.constant 0 : index
    %c0_7 = arith.constant 0 : index
    %9 = vector.load %arg4[%c0_6, %c0_7] : memref<128x128xbf16, #tpu.memory_space<vmem>>, vector<128x128xbf16>
    %cst_8 = arith.constant dense<0.000000e+00> : vector<8x128xf32>
    %10 = tpu.matmul %8, %9, %cst_8 {dimension_numbers = #tpu.dot_dimension_numbers<[1], [0], [0], [1], [0, 0, 1, 1], [], []>} : vector<8x128xbf16>, vector<128x128xbf16>, vector<8x128xf32> -> vector<8x128xf32>
    %c0_9 = arith.constant 0 : index
    %c0_10 = arith.constant 0 : index
    %11 = vector.load %arg5[%c0_9, %c0_10] : memref<1x128xf32, #tpu.memory_space<vmem>>, vector<1x128xf32>
    %12 = vector.broadcast %11 : vector<1x128xf32> to vector<8x128xf32>
    %13 = arith.addf %10, %12 : vector<8x128xf32>
    %cst_11 = arith.constant 0.000000e+00 : f32
    %14 = vector.broadcast %cst_11 : f32 to vector<8x128xf32>
    %15 = arith.maximumf %13, %14 : vector<8x128xf32>
    %16 = arith.truncf %15 : vector<8x128xf32> to vector<8x128xbf16>
    %c0_12 = arith.constant 0 : index
    %c0_13 = arith.constant 0 : index
    %17 = vector.load %arg6[%c0_12, %c0_13] : memref<128x128xbf16, #tpu.memory_space<vmem>>, vector<128x128xbf16>
    %cst_14 = arith.constant dense<0.000000e+00> : vector<8x128xf32>
    %18 = tpu.matmul %16, %17, %cst_14 {dimension_numbers = #tpu.dot_dimension_numbers<[1], [0], [0], [1], [0, 0, 1, 1], [], []>} : vector<8x128xbf16>, vector<128x128xbf16>, vector<8x128xf32> -> vector<8x128xf32>
    %c0_15 = arith.constant 0 : index
    %c0_16 = arith.constant 0 : index
    %19 = vector.load %arg7[%c0_15, %c0_16] : memref<1x128xf32, #tpu.memory_space<vmem>>, vector<1x128xf32>
    %20 = vector.broadcast %19 : vector<1x128xf32> to vector<8x128xf32>
    %21 = arith.addf %18, %20 : vector<8x128xf32>
    %c0_17 = arith.constant 0 : index
    %c0_18 = arith.constant 0 : index
    %22 = vector.load %arg8[%c0_17, %c0_18] : memref<8x128xf32, #tpu.memory_space<vmem>>, vector<8x128xf32>
    tpu.vector_store %arg8[%c0_17, %c0_18], %21 {strides = array<i32>} : memref<8x128xf32, #tpu.memory_space<vmem>>, vector<8x128xf32>,
    return
  }
  func.func @transform_0(%arg0: i32) -> (i32, i32) {
    %c0_i32 = arith.constant 0 : i32
    %c0_i32_0 = arith.constant 0 : i32
    return %arg0, %c0_i32 : i32, i32
  }
  func.func @transform_1(%arg0: i32) -> (i32, i32) {
    %c0_i32 = arith.constant 0 : i32
    %c0_i32_0 = arith.constant 0 : i32
    %c0_i32_1 = arith.constant 0 : i32
    return %c0_i32, %c0_i32_0 : i32, i32
  }
  func.func @transform_2(%arg0: i32) -> (i32, i32) {
    %c0_i32 = arith.constant 0 : i32
    %c0_i32_0 = arith.constant 0 : i32
    %c0_i32_1 = arith.constant 0 : i32
    return %c0_i32, %c0_i32_0 : i32, i32
  }
  func.func @transform_3(%arg0: i32) -> (i32, i32) {
    %c0_i32 = arith.constant 0 : i32
    %c0_i32_0 = arith.constant 0 : i32
    %c0_i32_1 = arith.constant 0 : i32
    return %c0_i32, %c0_i32_0 : i32, i32
  }
  func.func @transform_4(%arg0: i32) -> (i32, i32) {
    %c0_i32 = arith.constant 0 : i32
    %c0_i32_0 = arith.constant 0 : i32
    %c0_i32_1 = arith.constant 0 : i32
    return %c0_i32, %c0_i32_0 : i32, i32
  }
  func.func @transform_5(%arg0: i32) -> (i32, i32) {
    %c0_i32 = arith.constant 0 : i32
    %c0_i32_0 = arith.constant 0 : i32
    %c0_i32_1 = arith.constant 0 : i32
    return %c0_i32, %c0_i32_0 : i32, i32
  }
  func.func @transform_6(%arg0: i32) -> (i32, i32) {
    %c0_i32 = arith.constant 0 : i32
    %c0_i32_0 = arith.constant 0 : i32
    %c0_i32_1 = arith.constant 0 : i32
    return %c0_i32, %c0_i32_0 : i32, i32
  }
  func.func @transform_7(%arg0: i32) -> (i32, i32) {
    %c0_i32 = arith.constant 0 : i32
    %c0_i32_0 = arith.constant 0 : i32
    return %arg0, %c0_i32 : i32, i32
  }
}

</mosaic_0001>

<llo_original>
// kernel: mlp_forward.1
$region0: #{mlp_forward.1}
  #allocation0 [shape = 'u32[]', space=smem, size = 0x4, offset = 0x4, fixed_abs, tag = 'smem constant byte address 0x4 - core index']
  #allocation1 [shape = 'u32[72,128]{1,0:T(1,128)}', space=vmem, size = 0x9000, scoped, tag = 'internal scratch']
  %s0 = inlined_call_operand.vmem [shape: bf16[8,128], index: 0, kind: input, shape index: {}]
  %s1 = inlined_call_operand.hbm [shape: bf16[128,128], index: 1, kind: input, shape index: {}]
  %s2 = inlined_call_operand.vmem [shape: f32[1,128], index: 2, kind: input, shape index: {}]
  %s3 = inlined_call_operand.hbm [shape: bf16[128,128], index: 3, kind: input, shape index: {}]
  %s4 = inlined_call_operand.vmem [shape: f32[1,128], index: 4, kind: input, shape index: {}]
  %s5 = inlined_call_operand.hbm [shape: bf16[128,128], index: 5, kind: input, shape index: {}]
  %s6 = inlined_call_operand.vmem [shape: f32[1,128], index: 6, kind: input, shape index: {}]
  %s7 = inlined_call_operand.hbm [shape: f32[8,128], index: 7, kind: output, shape index: {}]
  %s8 = sld [smem:[#allocation0]]
  $region50: #{mlp_forward.1} parent=0
    _
  %s10 = ssub.s32 1, %s8
  %s11 = scalar_select 0, %s10, %s8
  $region1: #{mlp_forward.1} parent=0
    #allocation2 [shape = 'u8[32768]{0}', space=vmem, size = 0x8000, scoped, tag = 'input window, operand 1, single buffered']
    #allocation3 [shape = 's32[1]{0}', space=sflag, size = 0x4, scoped, tag = 'scoped memory for mlp_forward.1']
    #allocation4 [shape = 's32[1]{0}', space=sflag, size = 0x4, scoped, tag = 'scoped memory for mlp_forward.1']
    #allocation5 [shape = 'u8[32768]{0}', space=vmem, size = 0x8000, scoped, tag = 'input window, operand 3, single buffered']
    #allocation6 [shape = 's32[1]{0}', space=sflag, size = 0x4, scoped, tag = 'scoped memory for mlp_forward.1']
    #allocation7 [shape = 'u8[32768]{0}', space=vmem, size = 0x8000, scoped, tag = 'input window, operand 5, single buffered']
    #allocation8 [shape = 'u8[4096]{0}', space=vmem, size = 0x1000, scoped, tag = 'output window, operand 0, single buffered']
    %12 = vsyncpa [#allocation3], 0
    %13 = vsyncpa [#allocation6], 0
    %14 = vsyncpa [#allocation4], 0
    // Predicated region
    $region2: #{mlp_forward.1} parent=1 // pred_check
      _
    $region3: #{mlp_forward.1} parent=1 // pred_check_branch
      %16 = sbr.rel (0) target = $region5
    $region4: #{mlp_forward.1} parent=1 // pred_region
      _
    $region5: #{mlp_forward.1} parent=1 // pred_fallthru
      _
    // Predicated region
    $region6: #{mlp_forward.1} parent=1 // pred_check
      _
    $region7: #{mlp_forward.1} parent=1 // pred_check_branch
      %18 = sbr.rel (0) target = $region9
    $region8: #{mlp_forward.1} parent=1 // pred_region
      %20 = vsyncadd [#allocation3], 0
      %s21 = sshll.u32 %s1, 4
      %s22 = int_to_ptr.hbm [resolvable:$true] %s21
      %s23 = sshll.u32 [#allocation2], 4
      %s24 = int_to_ptr.vmem [resolvable:$true] %s23
      %29 = dma.hbm_to_vmem [thread:$0]  %s22, 1024, %s24, [#allocation3], 64, 64, 4
    $region9: #{mlp_forward.1} parent=1 // pred_fallthru
      _
    // Predicated region
    $region10: #{mlp_forward.1} parent=1 // pred_check
      _
    $region11: #{mlp_forward.1} parent=1 // pred_check_branch
      %31 = sbr.rel (0) target = $region13
    $region12: #{mlp_forward.1} parent=1 // pred_region
      _
    $region13: #{mlp_forward.1} parent=1 // pred_fallthru
      _
    // Predicated region
    $region14: #{mlp_forward.1} parent=1 // pred_check
      _
    $region15: #{mlp_forward.1} parent=1 // pred_check_branch
      %33 = sbr.rel (0) target = $region17
    $region16: #{mlp_forward.1} parent=1 // pred_region
      %35 = vsyncadd [#allocation6], 0
      %s36 = sshll.u32 %s3, 4
      %s37 = int_to_ptr.hbm [resolvable:$true] %s36
      %s38 = sshll.u32 [#allocation5], 4
      %s39 = int_to_ptr.vmem [resolvable:$true] %s38
      %44 = dma.hbm_to_vmem [thread:$0]  %s37, 1024, %s39, [#allocation6], 64, 64, 4
    $region17: #{mlp_forward.1} parent=1 // pred_fallthru
      _
    // Predicated region
    $region18: #{mlp_forward.1} parent=1 // pred_check
      _
    $region19: #{mlp_forward.1} parent=1 // pred_check_branch
      %46 = sbr.rel (0) target = $region21
    $region20: #{mlp_forward.1} parent=1 // pred_region
      _
    $region21: #{mlp_forward.1} parent=1 // pred_fallthru
      _
    // Predicated region
    $region22: #{mlp_forward.1} parent=1 // pred_check
      _
    $region23: #{mlp_forward.1} parent=1 // pred_check_branch
      %48 = sbr.rel (0) target = $region25
    $region24: #{mlp_forward.1} parent=1 // pred_region
      %50 = vsyncadd [#allocation6], 0
      %s51 = sshll.u32 %s5, 4
      %s52 = int_to_ptr.hbm [resolvable:$true] %s51
      %s53 = sshll.u32 [#allocation7], 4
      %s54 = int_to_ptr.vmem [resolvable:$true] %s53
      %59 = dma.hbm_to_vmem [thread:$0]  %s52, 1024, %s54, [#allocation6], 64, 64, 4
    $region25: #{mlp_forward.1} parent=1 // pred_fallthru
      _
    // Predicated region
    $region26: #{mlp_forward.1} parent=1 // pred_check
      _
    $region27: #{mlp_forward.1} parent=1 // pred_check_branch
      %61 = sbr.rel (0) target = $region29
    $region28: #{mlp_forward.1} parent=1 // pred_region
      _
    $region29: #{mlp_forward.1} parent=1 // pred_fallthru
      _
    // Predicated region
    $region30: #{mlp_forward.1} parent=1 // pred_check
      _
    $region31: #{mlp_forward.1} parent=1 // pred_check_branch
      %63 = sbr.rel (0) target = $region33
    $region32: #{mlp_forward.1} parent=1 // pred_region
      %65 = dma.done [#allocation3], 1024
    $region33: #{mlp_forward.1} parent=1 // pred_fallthru
      _
    // Predicated region
    $region34: #{mlp_forward.1} parent=1 // pred_check
      _
    $region35: #{mlp_forward.1} parent=1 // pred_check_branch
      %67 = sbr.rel (0) target = $region37
    $region36: #{mlp_forward.1} parent=1 // pred_region
      %69 = dma.done [#allocation6], 1024
    $region37: #{mlp_forward.1} parent=1 // pred_fallthru
      _
    // Predicated region
    $region38: #{mlp_forward.1} parent=1 // pred_check
      _
    $region39: #{mlp_forward.1} parent=1 // pred_check_branch
      %71 = sbr.rel (0) target = $region41
    $region40: #{mlp_forward.1} parent=1 // pred_region
      %73 = dma.done [#allocation6], 1024
    $region41: #{mlp_forward.1} parent=1 // pred_fallthru
      _
    %v74 = vld [vmem:[%s0] sm:$0xf]
    %v75 = vld [vmem:[#allocation2] sm:$0xf]
    %v76 = vld [vmem:[#allocation2 + $0x4] sm:$0xf]
    %v77 = vld [vmem:[#allocation2 + $0x8] sm:$0xf]
    %v78 = vld [vmem:[#allocation2 + $0xc] sm:$0xf]
    %v79 = vld [vmem:[#allocation2 + $0x10] sm:$0xf]
    %v80 = vld [vmem:[#allocation2 + $0x14] sm:$0xf]
    %v81 = vld [vmem:[#allocation2 + $0x18] sm:$0xf]
    %v82 = vld [vmem:[#allocation2 + $0x1c] sm:$0xf]
    %v83 = vld [vmem:[#allocation2 + $0x20] sm:$0xf]
    %v84 = vld [vmem:[#allocation2 + $0x24] sm:$0xf]
    %v85 = vld [vmem:[#allocation2 + $0x28] sm:$0xf]
    %v86 = vld [vmem:[#allocation2 + $0x2c] sm:$0xf]
    %v87 = vld [vmem:[#allocation2 + $0x30] sm:$0xf]
    %v88 = vld [vmem:[#allocation2 + $0x34] sm:$0xf]
    %v89 = vld [vmem:[#allocation2 + $0x38] sm:$0xf]
    %v90 = vld [vmem:[#allocation2 + $0x3c] sm:$0xf]
    %v91 = vld [vmem:[%s2] sm:$0x1]
    %v93 = vperm.slane %v91, 0
    %v111 = vunpack.c.l.b16 %v75
    %v112 = vunpack.c.l.b16 %v76
    %v113 = vunpack.c.l.b16 %v77
    %v114 = vunpack.c.l.b16 %v78
    %v115 = vunpack.c.l.b16 %v79
    %v116 = vunpack.c.l.b16 %v80
    %v117 = vunpack.c.l.b16 %v81
    %v118 = vunpack.c.l.b16 %v82
    %v119 = vunpack.c.l.b16 %v83
    %v120 = vunpack.c.l.b16 %v84
    %v121 = vunpack.c.l.b16 %v85
    %v122 = vunpack.c.l.b16 %v86
    %v123 = vunpack.c.l.b16 %v87
    %v124 = vunpack.c.l.b16 %v88
    %v125 = vunpack.c.l.b16 %v89
    %v126 = vunpack.c.l.b16 %v90
    %v127 = vpack.c.b16 %v112, %v111
    %v128 = vpack.c.b16 %v114, %v113
    %v129 = vpack.c.b16 %v116, %v115
    %v130 = vpack.c.b16 %v118, %v117
    %v131 = vpack.c.b16 %v120, %v119
    %v132 = vpack.c.b16 %v122, %v121
    %v133 = vpack.c.b16 %v124, %v123
    %v134 = vpack.c.b16 %v126, %v125
    %143 = vmatpush.bf16.msra.mxu0 %v134
    %144 = vmatpush.bf16.msra.mxu0 %v133
    %145 = vmatpush.bf16.msra.mxu0 %v132
    %146 = vmatpush.bf16.msra.mxu0 %v131
    %147 = vmatpush.bf16.msra.mxu0 %v130
    %148 = vmatpush.bf16.msra.mxu0 %v129
    %149 = vmatpush.bf16.msra.mxu0 %v128
    %150 = vmatpush.bf16.msra.mxu0 %v127
    %151 = vmatmul.bf16.gmra.mxu0 %v74
    %v152 = vpop.f32.mrf.mxu0
    %v153 = vadd.f32 %v93, %v152
    %v154 = vpop.f32.mrf.mxu0
    %155 = vdwg.mxu0
    %v156 = vmax.f32 %v153, 0.0
    %v157 = vpack.c.bf16 %v156, %v156
    %v158 = vld [vmem:[#allocation5] sm:$0xf]
    %v159 = vld [vmem:[#allocation5 + $0x4] sm:$0xf]
    %v160 = vld [vmem:[#allocation5 + $0x8] sm:$0xf]
    %v161 = vld [vmem:[#allocation5 + $0xc] sm:$0xf]
    %v162 = vld [vmem:[#allocation5 + $0x10] sm:$0xf]
    %v163 = vld [vmem:[#allocation5 + $0x14] sm:$0xf]
    %v164 = vld [vmem:[#allocation5 + $0x18] sm:$0xf]
    %v165 = vld [vmem:[#allocation5 + $0x1c] sm:$0xf]
    %v166 = vld [vmem:[#allocation5 + $0x20] sm:$0xf]
    %v167 = vld [vmem:[#allocation5 + $0x24] sm:$0xf]
    %v168 = vld [vmem:[#allocation5 + $0x28] sm:$0xf]
    %v169 = vld [vmem:[#allocation5 + $0x2c] sm:$0xf]
    %v170 = vld [vmem:[#allocation5 + $0x30] sm:$0xf]
    %v171 = vld [vmem:[#allocation5 + $0x34] sm:$0xf]
    %v172 = vld [vmem:[#allocation5 + $0x38] sm:$0xf]
    %v173 = vld [vmem:[#allocation5 + $0x3c] sm:$0xf]
    %v174 = vld [vmem:[%s4] sm:$0x1]
    %v176 = vperm.slane %v174, 0
    %v194 = vunpack.c.l.b16 %v158
    %v195 = vunpack.c.l.b16 %v159
    %v196 = vunpack.c.l.b16 %v160
    %v197 = vunpack.c.l.b16 %v161
    %v198 = vunpack.c.l.b16 %v162
    %v199 = vunpack.c.l.b16 %v163
    %v200 = vunpack.c.l.b16 %v164
    %v201 = vunpack.c.l.b16 %v165
    %v202 = vunpack.c.l.b16 %v166
    %v203 = vunpack.c.l.b16 %v167
    %v204 = vunpack.c.l.b16 %v168
    %v205 = vunpack.c.l.b16 %v169
    %v206 = vunpack.c.l.b16 %v170
    %v207 = vunpack.c.l.b16 %v171
    %v208 = vunpack.c.l.b16 %v172
    %v209 = vunpack.c.l.b16 %v173
    %v210 = vpack.c.b16 %v195, %v194
    %v211 = vpack.c.b16 %v197, %v196
    %v212 = vpack.c.b16 %v199, %v198
    %v213 = vpack.c.b16 %v201, %v200
    %v214 = vpack.c.b16 %v203, %v202
    %v215 = vpack.c.b16 %v205, %v204
    %v216 = vpack.c.b16 %v207, %v206
    %v217 = vpack.c.b16 %v209, %v208
    %226 = vmatpush.bf16.msra.mxu0 %v217
    %227 = vmatpush.bf16.msra.mxu0 %v216
    %228 = vmatpush.bf16.msra.mxu0 %v215
    %229 = vmatpush.bf16.msra.mxu0 %v214
    %230 = vmatpush.bf16.msra.mxu0 %v213
    %231 = vmatpush.bf16.msra.mxu0 %v212
    %232 = vmatpush.bf16.msra.mxu0 %v211
    %233 = vmatpush.bf16.msra.mxu0 %v210
    %234 = vmatmul.bf16.gmra.mxu0 %v157
    %v235 = vpop.f32.mrf.mxu0
    %v236 = vadd.f32 %v176, %v235
    %v237 = vpop.f32.mrf.mxu0
    %238 = vdwg.mxu0
    %v239 = vmax.f32 %v236, 0.0
    %v240 = vpack.c.bf16 %v239, %v239
    %v241 = vld [vmem:[#allocation7] sm:$0xf]
    %v242 = vld [vmem:[#allocation7 + $0x4] sm:$0xf]
    %v243 = vld [vmem:[#allocation7 + $0x8] sm:$0xf]
    %v244 = vld [vmem:[#allocation7 + $0xc] sm:$0xf]
    %v245 = vld [vmem:[#allocation7 + $0x10] sm:$0xf]
    %v246 = vld [vmem:[#allocation7 + $0x14] sm:$0xf]
    %v247 = vld [vmem:[#allocation7 + $0x18] sm:$0xf]
    %v248 = vld [vmem:[#allocation7 + $0x1c] sm:$0xf]
    %v249 = vld [vmem:[#allocation7 + $0x20] sm:$0xf]
    %v250 = vld [vmem:[#allocation7 + $0x24] sm:$0xf]
    %v251 = vld [vmem:[#allocation7 + $0x28] sm:$0xf]
    %v252 = vld [vmem:[#allocation7 + $0x2c] sm:$0xf]
    %v253 = vld [vmem:[#allocation7 + $0x30] sm:$0xf]
    %v254 = vld [vmem:[#allocation7 + $0x34] sm:$0xf]
    %v255 = vld [vmem:[#allocation7 + $0x38] sm:$0xf]
    %v256 = vld [vmem:[#allocation7 + $0x3c] sm:$0xf]
    %v257 = vld [vmem:[%s6] sm:$0x1]
    %v259 = vperm.slane %v257, 0
    %v277 = vunpack.c.l.b16 %v241
    %v278 = vunpack.c.l.b16 %v242
    %v279 = vunpack.c.l.b16 %v243
    %v280 = vunpack.c.l.b16 %v244
    %v281 = vunpack.c.l.b16 %v245
    %v282 = vunpack.c.l.b16 %v246
    %v283 = vunpack.c.l.b16 %v247
    %v284 = vunpack.c.l.b16 %v248
    %v285 = vunpack.c.l.b16 %v249
    %v286 = vunpack.c.l.b16 %v250
    %v287 = vunpack.c.l.b16 %v251
    %v288 = vunpack.c.l.b16 %v252
    %v289 = vunpack.c.l.b16 %v253
    %v290 = vunpack.c.l.b16 %v254
    %v291 = vunpack.c.l.b16 %v255
    %v292 = vunpack.c.l.b16 %v256
    %v293 = vpack.c.b16 %v278, %v277
    %v294 = vpack.c.b16 %v280, %v279
    %v295 = vpack.c.b16 %v282, %v281
    %v296 = vpack.c.b16 %v284, %v283
    %v297 = vpack.c.b16 %v286, %v285
    %v298 = vpack.c.b16 %v288, %v287
    %v299 = vpack.c.b16 %v290, %v289
    %v300 = vpack.c.b16 %v292, %v291
    %309 = vmatpush.bf16.msra.mxu0 %v300
    %310 = vmatpush.bf16.msra.mxu0 %v299
    %311 = vmatpush.bf16.msra.mxu0 %v298
    %312 = vmatpush.bf16.msra.mxu0 %v297
    %313 = vmatpush.bf16.msra.mxu0 %v296
    %314 = vmatpush.bf16.msra.mxu0 %v295
    %315 = vmatpush.bf16.msra.mxu0 %v294
    %316 = vmatpush.bf16.msra.mxu0 %v293
    %317 = vmatmul.bf16.gmra.mxu0 %v240
    %v318 = vpop.f32.mrf.mxu0
    %v319 = vadd.f32 %v259, %v318
    %v320 = vpop.f32.mrf.mxu0
    %321 = vdwg.mxu0
    %322 = vst [vmem:[#allocation8] sm:$0xff] %v319
    // Predicated region
    $region42: #{mlp_forward.1} parent=1 // pred_check
      _
    $region43: #{mlp_forward.1} parent=1 // pred_check_branch
      %324 = sbr.rel (0) target = $region45
    $region44: #{mlp_forward.1} parent=1 // pred_region
      %326 = vsyncadd [#allocation4], 0
      %s328 = sshll.u32 [#allocation8], 4
      %s329 = int_to_ptr.vmem [resolvable:$true] %s328
      %s330 = sshll.u32 %s7, 4
      %s331 = int_to_ptr.hbm [resolvable:$true] %s330
      %333 = dma.vmem_to_hbm [thread:$0]  %s329, 128, %s331, [#allocation4]
    $region45: #{mlp_forward.1} parent=1 // pred_fallthru
      _
    // Predicated region
    $region46: #{mlp_forward.1} parent=1 // pred_check
      _
    $region47: #{mlp_forward.1} parent=1 // pred_check_branch
      %335 = sbr.rel (0) target = $region49
    $region48: #{mlp_forward.1} parent=1 // pred_region
      %337 = dma.done [#allocation4], 128
    $region49: #{mlp_forward.1} parent=1 // pred_fallthru
      _
    %338 = vsyncpa [#allocation3], 1
    %339 = vsyncpa [#allocation6], 1
    %340 = vsyncpa [#allocation4], 1

// kernel: mlp_forward.1
$region0: #{mlp_forward.1}
  #allocation0 [shape = 'u32[]', space=smem, size = 0x4, offset = 0x4, fixed_abs, tag = 'smem constant byte address 0x4 - core index']
  #allocation1 [shape = 'u32[72,128]{1,0:T(1,128)}', space=vmem, size = 0x9000, scoped, tag = 'internal scratch']
  %s0 = inlined_call_operand.vmem [shape: bf16[8,128], index: 0, kind: input, shape index: {}]
  %s1 = inlined_call_operand.hbm [shape: bf16[128,128], index: 1, kind: input, shape index: {}]
  %s2 = inlined_call_operand.vmem [shape: f32[1,128], index: 2, kind: input, shape index: {}]
  %s3 = inlined_call_operand.hbm [shape: bf16[128,128], index: 3, kind: input, shape index: {}]
  %s4 = inlined_call_operand.vmem [shape: f32[1,128], index: 4, kind: input, shape index: {}]
  %s5 = inlined_call_operand.hbm [shape: bf16[128,128], index: 5, kind: input, shape index: {}]
  %s6 = inlined_call_operand.vmem [shape: f32[1,128], index: 6, kind: input, shape index: {}]
  %s7 = inlined_call_operand.hbm [shape: f32[8,128], index: 7, kind: output, shape index: {}]
  %s8 = sld [smem:[#allocation0]]
  $region50: #{mlp_forward.1} parent=0
    _
  %s10 = ssub.s32 1, %s8
  %s11 = scalar_select 0, %s10, %s8
  $region1: #{mlp_forward.1} parent=0
    #allocation2 [shape = 'u8[32768]{0}', space=vmem, size = 0x8000, scoped, tag = 'input window, operand 1, single buffered']
    #allocation3 [shape = 's32[1]{0}', space=sflag, size = 0x4, scoped, tag = 'scoped memory for mlp_forward.1']
    #allocation4 [shape = 's32[1]{0}', space=sflag, size = 0x4, scoped, tag = 'scoped memory for mlp_forward.1']
    #allocation5 [shape = 'u8[32768]{0}', space=vmem, size = 0x8000, scoped, tag = 'input window, operand 3, single buffered']
    #allocation6 [shape = 's32[1]{0}', space=sflag, size = 0x4, scoped, tag = 'scoped memory for mlp_forward.1']
    #allocation7 [shape = 'u8[32768]{0}', space=vmem, size = 0x8000, scoped, tag = 'input window, operand 5, single buffered']
    #allocation8 [shape = 'u8[4096]{0}', space=vmem, size = 0x1000, scoped, tag = 'output window, operand 0, single buffered']
    %12 = vsyncpa [#allocation3], 0
    %13 = vsyncpa [#allocation6], 0
    %14 = vsyncpa [#allocation4], 0
    // Predicated region
    $region2: #{mlp_forward.1} parent=1 // pred_check
      _
    $region3: #{mlp_forward.1} parent=1 // pred_check_branch
      %16 = sbr.rel (0) target = $region5
    $region4: #{mlp_forward.1} parent=1 // pred_region
      _
    $region5: #{mlp_forward.1} parent=1 // pred_fallthru
      _
    // Predicated region
    $region6: #{mlp_forward.1} parent=1 // pred_check
      _
    $region7: #{mlp_forward.1} parent=1 // pred_check_branch
      %18 = sbr.rel (0) target = $region9
    $region8: #{mlp_forward.1} parent=1 // pred_region
      %20 = vsyncadd [#allocation3], 0
      %s21 = sshll.u32 %s1, 4
      %s22 = int_to_ptr.hbm [resolvable:$true] %s21
      %s23 = sshll.u32 [#allocation2], 4
      %s24 = int_to_ptr.vmem [resolvable:$true] %s23
      %29 = dma.hbm_to_vmem [thread:$0]  %s22, 1024, %s24, [#allocation3], 64, 64, 4
    $region9: #{mlp_forward.1} parent=1 // pred_fallthru
      _
    // Predicated region
    $region10: #{mlp_forward.1} parent=1 // pred_check
      _
    $region11: #{mlp_forward.1} parent=1 // pred_check_branch
      %31 = sbr.rel (0) target = $region13
    $region12: #{mlp_forward.1} parent=1 // pred_region
      _
    $region13: #{mlp_forward.1} parent=1 // pred_fallthru
      _
    // Predicated region
    $region14: #{mlp_forward.1} parent=1 // pred_check
      _
    $region15: #{mlp_forward.1} parent=1 // pred_check_branch
      %33 = sbr.rel (0) target = $region17
    $region16: #{mlp_forward.1} parent=1 // pred_region
      %35 = vsyncadd [#allocation6], 0
      %s36 = sshll.u32 %s3, 4
      %s37 = int_to_ptr.hbm [resolvable:$true] %s36
      %s38 = sshll.u32 [#allocation5], 4
      %s39 = int_to_ptr.vmem [resolvable:$true] %s38
      %44 = dma.hbm_to_vmem [thread:$0]  %s37, 1024, %s39, [#allocation6], 64, 64, 4
    $region17: #{mlp_forward.1} parent=1 // pred_fallthru
      _
    // Predicated region
    $region18: #{mlp_forward.1} parent=1 // pred_check
      _
    $region19: #{mlp_forward.1} parent=1 // pred_check_branch
      %46 = sbr.rel (0) target = $region21
    $region20: #{mlp_forward.1} parent=1 // pred_region
      _
    $region21: #{mlp_forward.1} parent=1 // pred_fallthru
      _
    // Predicated region
    $region22: #{mlp_forward.1} parent=1 // pred_check
      _
    $region23: #{mlp_forward.1} parent=1 // pred_check_branch
      %48 = sbr.rel (0) target = $region25
    $region24: #{mlp_forward.1} parent=1 // pred_region
      %50 = vsyncadd [#allocation6], 0
      %s51 = sshll.u32 %s5, 4
      %s52 = int_to_ptr.hbm [resolvable:$true] %s51
      %s53 = sshll.u32 [#allocation7], 4
      %s54 = int_to_ptr.vmem [resolvable:$true] %s53
      %59 = dma.hbm_to_vmem [thread:$0]  %s52, 1024, %s54, [#allocation6], 64, 64, 4
    $region25: #{mlp_forward.1} parent=1 // pred_fallthru
      _
    // Predicated region
    $region26: #{mlp_forward.1} parent=1 // pred_check
      _
    $region27: #{mlp_forward.1} parent=1 // pred_check_branch
      %61 = sbr.rel (0) target = $region29
    $region28: #{mlp_forward.1} parent=1 // pred_region
      _
    $region29: #{mlp_forward.1} parent=1 // pred_fallthru
      _
    // Predicated region
    $region30: #{mlp_forward.1} parent=1 // pred_check
      _
    $region31: #{mlp_forward.1} parent=1 // pred_check_branch
      %63 = sbr.rel (0) target = $region33
    $region32: #{mlp_forward.1} parent=1 // pred_region
      %65 = dma.done [#allocation3], 1024
    $region33: #{mlp_forward.1} parent=1 // pred_fallthru
      _
    // Predicated region
    $region34: #{mlp_forward.1} parent=1 // pred_check
      _
    $region35: #{mlp_forward.1} parent=1 // pred_check_branch
      %67 = sbr.rel (0) target = $region37
    $region36: #{mlp_forward.1} parent=1 // pred_region
      %69 = dma.done [#allocation6], 1024
    $region37: #{mlp_forward.1} parent=1 // pred_fallthru
      _
    // Predicated region
    $region38: #{mlp_forward.1} parent=1 // pred_check
      _
    $region39: #{mlp_forward.1} parent=1 // pred_check_branch
      %71 = sbr.rel (0) target = $region41
    $region40: #{mlp_forward.1} parent=1 // pred_region
      %73 = dma.done [#allocation6], 1024
    $region41: #{mlp_forward.1} parent=1 // pred_fallthru
      _
    %v74 = vld [vmem:[%s0] sm:$0xf]
    %v75 = vld [vmem:[#allocation2] sm:$0xf]
    %v76 = vld [vmem:[#allocation2 + $0x4] sm:$0xf]
    %v77 = vld [vmem:[#allocation2 + $0x8] sm:$0xf]
    %v78 = vld [vmem:[#allocation2 + $0xc] sm:$0xf]
    %v79 = vld [vmem:[#allocation2 + $0x10] sm:$0xf]
    %v80 = vld [vmem:[#allocation2 + $0x14] sm:$0xf]
    %v81 = vld [vmem:[#allocation2 + $0x18] sm:$0xf]
    %v82 = vld [vmem:[#allocation2 + $0x1c] sm:$0xf]
    %v83 = vld [vmem:[#allocation2 + $0x20] sm:$0xf]
    %v84 = vld [vmem:[#allocation2 + $0x24] sm:$0xf]
    %v85 = vld [vmem:[#allocation2 + $0x28] sm:$0xf]
    %v86 = vld [vmem:[#allocation2 + $0x2c] sm:$0xf]
    %v87 = vld [vmem:[#allocation2 + $0x30] sm:$0xf]
    %v88 = vld [vmem:[#allocation2 + $0x34] sm:$0xf]
    %v89 = vld [vmem:[#allocation2 + $0x38] sm:$0xf]
    %v90 = vld [vmem:[#allocation2 + $0x3c] sm:$0xf]
    %v91 = vld [vmem:[%s2] sm:$0x1]
    %v93 = vperm.slane %v91, 0
    %v111 = vunpack.c.l.b16 %v75
    %v112 = vunpack.c.l.b16 %v76
    %v113 = vunpack.c.l.b16 %v77
    %v114 = vunpack.c.l.b16 %v78
    %v115 = vunpack.c.l.b16 %v79
    %v116 = vunpack.c.l.b16 %v80
    %v117 = vunpack.c.l.b16 %v81
    %v118 = vunpack.c.l.b16 %v82
    %v119 = vunpack.c.l.b16 %v83
    %v120 = vunpack.c.l.b16 %v84
    %v121 = vunpack.c.l.b16 %v85
    %v122 = vunpack.c.l.b16 %v86
    %v123 = vunpack.c.l.b16 %v87
    %v124 = vunpack.c.l.b16 %v88
    %v125 = vunpack.c.l.b16 %v89
    %v126 = vunpack.c.l.b16 %v90
    %v127 = vpack.c.b16 %v112, %v111
    %v128 = vpack.c.b16 %v114, %v113
    %v129 = vpack.c.b16 %v116, %v115
    %v130 = vpack.c.b16 %v118, %v117
    %v131 = vpack.c.b16 %v120, %v119
    %v132 = vpack.c.b16 %v122, %v121
    %v133 = vpack.c.b16 %v124, %v123
    %v134 = vpack.c.b16 %v126, %v125
    %143 = vmatpush.bf16.msra.mxu0 %v134
    %144 = vmatpush.bf16.msra.mxu0 %v133
    %145 = vmatpush.bf16.msra.mxu0 %v132
    %146 = vmatpush.bf16.msra.mxu0 %v131
    %147 = vmatpush.bf16.msra.mxu0 %v130
    %148 = vmatpush.bf16.msra.mxu0 %v129
    %149 = vmatpush.bf16.msra.mxu0 %v128
    %150 = vmatpush.bf16.msra.mxu0 %v127
    %151 = vmatmul.bf16.gmra.mxu0 %v74
    %v152 = vpop.f32.mrf.mxu0
    %v153 = vadd.f32 %v93, %v152
    %v154 = vpop.f32.mrf.mxu0
    %155 = vdwg.mxu0
    %v156 = vmax.f32 %v153, 0.0
    %v157 = vpack.c.bf16 %v156, %v156
    %v158 = vld [vmem:[#allocation5] sm:$0xf]
    %v159 = vld [vmem:[#allocation5 + $0x4] sm:$0xf]
    %v160 = vld [vmem:[#allocation5 + $0x8] sm:$0xf]
    %v161 = vld [vmem:[#allocation5 + $0xc] sm:$0xf]
    %v162 = vld [vmem:[#allocation5 + $0x10] sm:$0xf]
    %v163 = vld [vmem:[#allocation5 + $0x14] sm:$0xf]
    %v164 = vld [vmem:[#allocation5 + $0x18] sm:$0xf]
    %v165 = vld [vmem:[#allocation5 + $0x1c] sm:$0xf]
    %v166 = vld [vmem:[#allocation5 + $0x20] sm:$0xf]
    %v167 = vld [vmem:[#allocation5 + $0x24] sm:$0xf]
    %v168 = vld [vmem:[#allocation5 + $0x28] sm:$0xf]
    %v169 = vld [vmem:[#allocation5 + $0x2c] sm:$0xf]
    %v170 = vld [vmem:[#allocation5 + $0x30] sm:$0xf]
    %v171 = vld [vmem:[#allocation5 + $0x34] sm:$0xf]
    %v172 = vld [vmem:[#allocation5 + $0x38] sm:$0xf]
    %v173 = vld [vmem:[#allocation5 + $0x3c] sm:$0xf]
    %v174 = vld [vmem:[%s4] sm:$0x1]
    %v176 = vperm.slane %v174, 0
    %v194 = vunpack.c.l.b16 %v158
    %v195 = vunpack.c.l.b16 %v159
    %v196 = vunpack.c.l.b16 %v160
    %v197 = vunpack.c.l.b16 %v161
    %v198 = vunpack.c.l.b16 %v162
    %v199 = vunpack.c.l.b16 %v163
    %v200 = vunpack.c.l.b16 %v164
    %v201 = vunpack.c.l.b16 %v165
    %v202 = vunpack.c.l.b16 %v166
    %v203 = vunpack.c.l.b16 %v167
    %v204 = vunpack.c.l.b16 %v168
    %v205 = vunpack.c.l.b16 %v169
    %v206 = vunpack.c.l.b16 %v170
    %v207 = vunpack.c.l.b16 %v171
    %v208 = vunpack.c.l.b16 %v172
    %v209 = vunpack.c.l.b16 %v173
    %v210 = vpack.c.b16 %v195, %v194
    %v211 = vpack.c.b16 %v197, %v196
    %v212 = vpack.c.b16 %v199, %v198
    %v213 = vpack.c.b16 %v201, %v200
    %v214 = vpack.c.b16 %v203, %v202
    %v215 = vpack.c.b16 %v205, %v204
    %v216 = vpack.c.b16 %v207, %v206
    %v217 = vpack.c.b16 %v209, %v208
    %226 = vmatpush.bf16.msra.mxu0 %v217
    %227 = vmatpush.bf16.msra.mxu0 %v216
    %228 = vmatpush.bf16.msra.mxu0 %v215
    %229 = vmatpush.bf16.msra.mxu0 %v214
    %230 = vmatpush.bf16.msra.mxu0 %v213
    %231 = vmatpush.bf16.msra.mxu0 %v212
    %232 = vmatpush.bf16.msra.mxu0 %v211
    %233 = vmatpush.bf16.msra.mxu0 %v210
    %234 = vmatmul.bf16.gmra.mxu0 %v157
    %v235 = vpop.f32.mrf.mxu0
    %v236 = vadd.f32 %v176, %v235
    %v237 = vpop.f32.mrf.mxu0
    %238 = vdwg.mxu0
    %v239 = vmax.f32 %v236, 0.0
    %v240 = vpack.c.bf16 %v239, %v239
    %v241 = vld [vmem:[#allocation7] sm:$0xf]
    %v242 = vld [vmem:[#allocation7 + $0x4] sm:$0xf]
    %v243 = vld [vmem:[#allocation7 + $0x8] sm:$0xf]
    %v244 = vld [vmem:[#allocation7 + $0xc] sm:$0xf]
    %v245 = vld [vmem:[#allocation7 + $0x10] sm:$0xf]
    %v246 = vld [vmem:[#allocation7 + $0x14] sm:$0xf]
    %v247 = vld [vmem:[#allocation7 + $0x18] sm:$0xf]
    %v248 = vld [vmem:[#allocation7 + $0x1c] sm:$0xf]
    %v249 = vld [vmem:[#allocation7 + $0x20] sm:$0xf]
    %v250 = vld [vmem:[#allocation7 + $0x24] sm:$0xf]
    %v251 = vld [vmem:[#allocation7 + $0x28] sm:$0xf]
    %v252 = vld [vmem:[#allocation7 + $0x2c] sm:$0xf]
    %v253 = vld [vmem:[#allocation7 + $0x30] sm:$0xf]
    %v254 = vld [vmem:[#allocation7 + $0x34] sm:$0xf]
    %v255 = vld [vmem:[#allocation7 + $0x38] sm:$0xf]
    %v256 = vld [vmem:[#allocation7 + $0x3c] sm:$0xf]
    %v257 = vld [vmem:[%s6] sm:$0x1]
    %v259 = vperm.slane %v257, 0
    %v277 = vunpack.c.l.b16 %v241
    %v278 = vunpack.c.l.b16 %v242
    %v279 = vunpack.c.l.b16 %v243
    %v280 = vunpack.c.l.b16 %v244
    %v281 = vunpack.c.l.b16 %v245
    %v282 = vunpack.c.l.b16 %v246
    %v283 = vunpack.c.l.b16 %v247
    %v284 = vunpack.c.l.b16 %v248
    %v285 = vunpack.c.l.b16 %v249
    %v286 = vunpack.c.l.b16 %v250
    %v287 = vunpack.c.l.b16 %v251
    %v288 = vunpack.c.l.b16 %v252
    %v289 = vunpack.c.l.b16 %v253
    %v290 = vunpack.c.l.b16 %v254
    %v291 = vunpack.c.l.b16 %v255
    %v292 = vunpack.c.l.b16 %v256
    %v293 = vpack.c.b16 %v278, %v277
    %v294 = vpack.c.b16 %v280, %v279
    %v295 = vpack.c.b16 %v282, %v281
    %v296 = vpack.c.b16 %v284, %v283
    %v297 = vpack.c.b16 %v286, %v285
    %v298 = vpack.c.b16 %v288, %v287
    %v299 = vpack.c.b16 %v290, %v289
    %v300 = vpack.c.b16 %v292, %v291
    %309 = vmatpush.bf16.msra.mxu0 %v300
    %310 = vmatpush.bf16.msra.mxu0 %v299
    %311 = vmatpush.bf16.msra.mxu0 %v298
    %312 = vmatpush.bf16.msra.mxu0 %v297
    %313 = vmatpush.bf16.msra.mxu0 %v296
    %314 = vmatpush.bf16.msra.mxu0 %v295
    %315 = vmatpush.bf16.msra.mxu0 %v294
    %316 = vmatpush.bf16.msra.mxu0 %v293
    %317 = vmatmul.bf16.gmra.mxu0 %v240
    %v318 = vpop.f32.mrf.mxu0
    %v319 = vadd.f32 %v259, %v318
    %v320 = vpop.f32.mrf.mxu0
    %321 = vdwg.mxu0
    %322 = vst [vmem:[#allocation8] sm:$0xff] %v319
    // Predicated region
    $region42: #{mlp_forward.1} parent=1 // pred_check
      _
    $region43: #{mlp_forward.1} parent=1 // pred_check_branch
      %324 = sbr.rel (0) target = $region45
    $region44: #{mlp_forward.1} parent=1 // pred_region
      %326 = vsyncadd [#allocation4], 0
      %s328 = sshll.u32 [#allocation8], 4
      %s329 = int_to_ptr.vmem [resolvable:$true] %s328
      %s330 = sshll.u32 %s7, 4
      %s331 = int_to_ptr.hbm [resolvable:$true] %s330
      %333 = dma.vmem_to_hbm [thread:$0]  %s329, 128, %s331, [#allocation4]
    $region45: #{mlp_forward.1} parent=1 // pred_fallthru
      _
    // Predicated region
    $region46: #{mlp_forward.1} parent=1 // pred_check
      _
    $region47: #{mlp_forward.1} parent=1 // pred_check_branch
      %335 = sbr.rel (0) target = $region49
    $region48: #{mlp_forward.1} parent=1 // pred_region
      %337 = dma.done [#allocation4], 128
    $region49: #{mlp_forward.1} parent=1 // pred_fallthru
      _
    %338 = vsyncpa [#allocation3], 1
    %339 = vsyncpa [#allocation6], 1
    %340 = vsyncpa [#allocation4], 1

</llo_original>
